<compile_context>
chip_gen: v7x
topology: tpu7x:2x2x1
jax: 0.10.0
libtpu: 0.0.40
codegen_flags: <defaults>
</compile_context>

<pallas_src>
import functools

import numpy as np
import jax
import jax.numpy as jnp
from jax import lax
from jax.experimental import pallas as pl
from jax.experimental.pallas import tpu as pltpu

K = 3            # kernel_size of the ConvTranspose2d
NEG_SLOPE = 0.01 # LeakyReLU default negative_slope
BN_EPS = 1e-5    # BatchNorm2d default eps
TILE_M = 256     # rows (n,ho,wo) per grid step; multiple of the 8-sublane tile


def conv_stats_kernel(x_ref, w_ref, y_ref, st_ref, *, m_true, tm):
    """One row-tile of the transpose-conv + per-tile BN partial statistics.

    x_ref : (tm, K*K*Ci) bf16   im2col'd input rows, all taps folded into lanes
    w_ref : (K*K*Ci, Co) bf16   spatially-flipped, flattened ConvTranspose2d weight
    y_ref : (tm, Co)     f32    pre-BN activations for this tile
    st_ref: (1, 2, Co)   f32    row 0 = tile sum, row 1 = tile centered M2
    """
    t = pl.program_id(0)
    y = jnp.dot(x_ref[...], w_ref[...], preferred_element_type=jnp.float32)
    y_ref[...] = y

    # Rows padded past m_true are exact zeros (zero input rows @ W, no bias),
    # so the sum is exact; mask them out of the centered second moment.
    count = jnp.minimum(tm, m_true - t * tm).astype(jnp.float32)
    s = jnp.sum(y, axis=0, keepdims=True)                       # (1, Co)
    mean_t = s / count
    rows = lax.broadcasted_iota(jnp.int32, (tm, 1), 0) + t * tm
    d = jnp.where(rows < m_true, y - mean_t, 0.0)
    m2 = jnp.sum(d * d, axis=0, keepdims=True)                  # (1, Co)
    st_ref[0] = jnp.concatenate([s, m2], axis=0)                # (2, Co)


def norm_kernel(y_ref, p_ref, o_ref):
    """Folded BN affine + LeakyReLU on one row-tile (in place over y)."""
    z = y_ref[...] * p_ref[0:1, :] + p_ref[1:2, :]
    o_ref[...] = jnp.maximum(z, NEG_SLOPE * z).astype(o_ref.dtype)


def _round_up(x, m):
    return (x + m - 1) // m * m


@jax.jit
def up_forward(x_nchw, w_pt, bias, gamma, beta):
    """x_nchw: (N, Cin, H, W) f32.  w_pt: (Cin, Cout, K, K) torch ConvTranspose2d
    weight.  Returns (N, Cout, H+K-1, W+K-1) f32 NCHW matching the torch module.

    `bias` is accepted for API parity but is mathematically annihilated by the
    training-mode BatchNorm mean subtraction, so it never reaches the kernel.
    (If eval-mode running stats were used, the bias would have to come back.)
    """
    del bias
    N, Ci, H, W = x_nchw.shape
    Co = w_pt.shape[1]
    Ho, Wo = H + K - 1, W + K - 1
    M = N * Ho * Wo
    tm = TILE_M
    m_pad = _round_up(M, tm)
    n_tiles = m_pad // tm

    # ---- host-side layout: im2col with ALL K*K taps folded into lanes ----
    # ConvTranspose2d(stride=1, pad=0) == full correlation with the spatially
    # flipped kernel over an input zero-padded by K-1 on every side.
    x_nhwc = jnp.transpose(x_nchw, (0, 2, 3, 1))                       # (N,H,W,Ci)
    x_pad = jnp.pad(x_nhwc, ((0, 0), (K - 1, K - 1), (K - 1, K - 1), (0, 0)))
    taps = [x_pad[:, kh:kh + Ho, kw:kw + Wo, :]
            for kh in range(K) for kw in range(K)]
    x2d = jnp.concatenate(taps, axis=-1).reshape(M, K * K * Ci)
    x2d = jnp.pad(x2d, ((0, m_pad - M), (0, 0))).astype(jnp.bfloat16)

    # Weight rows ordered (kh, kw, ci) to match the tap concatenation above.
    w_mat = jnp.transpose(w_pt[:, :, ::-1, ::-1], (2, 3, 0, 1))
    w_mat = w_mat.reshape(K * K * Ci, Co).astype(jnp.bfloat16)

    # ---- Call 1: conv (one MXU matmul per tile) + per-tile BN partials ----
    conv = functools.partial(conv_stats_kernel, m_true=M, tm=tm)
    y, stats = pl.pallas_call(
        conv,
        grid=(n_tiles,),
        in_specs=[pl.BlockSpec((tm, K * K * Ci), lambda t: (t, 0)),
                  pl.BlockSpec((K * K * Ci, Co), lambda t: (0, 0))],
        out_specs=[pl.BlockSpec((tm, Co), lambda t: (t, 0)),
                   pl.BlockSpec((1, 2, Co), lambda t: (t, 0, 0))],
        out_shape=(jax.ShapeDtypeStruct((m_pad, Co), jnp.float32),
                   jax.ShapeDtypeStruct((n_tiles, 2, Co), jnp.float32)),
        compiler_params=pltpu.CompilerParams(
            dimension_semantics=("parallel",)),
    )(x2d, w_mat)

    # ---- host: Chan combine of per-tile (sum, M2) -> one BN affine (tiny) ----
    counts = jnp.clip(M - jnp.arange(n_tiles) * tm, 0, tm).astype(jnp.float32)[:, None]
    sums, m2s = stats[:, 0, :], stats[:, 1, :]
    mean = jnp.sum(sums, axis=0) / M
    m2 = jnp.sum(m2s + counts * (sums / counts - mean[None, :]) ** 2, axis=0)
    var = m2 / M                                     # biased, like torch BN training
    scale = gamma.astype(jnp.float32) * lax.rsqrt(var + BN_EPS)
    shift = beta.astype(jnp.float32) - mean * scale
    params = jnp.stack([scale, shift], axis=0)       # (2, Co)

    # ---- Call 2: normalize + LeakyReLU, in place over the pre-BN buffer ----
    out = pl.pallas_call(
        norm_kernel,
        grid=(n_tiles,),
        in_specs=[pl.BlockSpec((tm, Co), lambda t: (t, 0)),
                  pl.BlockSpec((2, Co), lambda t: (0, 0))],
        out_specs=pl.BlockSpec((tm, Co), lambda t: (t, 0)),
        out_shape=jax.ShapeDtypeStruct((m_pad, Co), jnp.float32),
        input_output_aliases={0: 0},
        compiler_params=pltpu.CompilerParams(
            dimension_semantics=("parallel",)),
    )(y, params)

    out = out[:M].reshape(N, Ho, Wo, Co)
    return jnp.transpose(out, (0, 3, 1, 2))          # back to NCHW


def reference_numpy(x, w, b, g, beta):
    """Independent NCHW reference: scatter formulation of ConvTranspose2d."""
    N, Ci, H, W = x.shape
    Co = w.shape[1]
    Ho, Wo = H + K - 1, W + K - 1
    y = np.zeros((N, Co, Ho, Wo), np.float64)
    for kh in range(K):
        for kw in range(K):
            y[:, :, kh:kh + H, kw:kw + W] += np.einsum(
                "ncij,cf->nfij", x.astype(np.float64), w[:, :, kh, kw].astype(np.float64))
    y += b[None, :, None, None]
    mean = y.mean(axis=(0, 2, 3), keepdims=True)
    var = y.var(axis=(0, 2, 3), keepdims=True)  # biased, like torch BN training
    y = (y - mean) / np.sqrt(var + BN_EPS) * g[None, :, None, None] + beta[None, :, None, None]
    return np.where(y > 0, y, NEG_SLOPE * y).astype(np.float32)


if __name__ == "__main__":
    # small shapes: batch=2, in_channels=4, out_channels=8, spatial=16
    N, Ci, Co, H, W = 2, 4, 8, 16, 16

    key = jax.random.PRNGKey(0)
    kx, kw, kb, kg, kbt = jax.random.split(key, 5)
    x = jax.random.normal(kx, (N, Ci, H, W), jnp.float32)
    w_pt = jax.random.normal(kw, (Ci, Co, K, K), jnp.float32) * 0.1   # ConvTranspose2d weight
    bias = jax.random.normal(kb, (Co,), jnp.float32) * 0.1            # ConvTranspose2d bias
    gamma = 1.0 + 0.1 * jax.random.normal(kg, (Co,), jnp.float32)     # BN weight
    beta = 0.1 * jax.random.normal(kbt, (Co,), jnp.float32)           # BN bias

    out = up_forward(x, w_pt, bias, gamma, beta)
    out = jax.block_until_ready(out)

    ref = reference_numpy(np.asarray(x), np.asarray(w_pt), np.asarray(bias),
                          np.asarray(gamma), np.asarray(beta))
    assert out.shape == (N, Co, H + K - 1, W + K - 1), out.shape
    # bf16 MXU inputs (f32 accumulation) -> ~1e-3 typical abs error post-BN.
    np.testing.assert_allclose(np.asarray(out), ref, rtol=3e-2, atol=3e-2)

    print("KERNEL_OK")
</pallas_src>

<mosaic_0001>
module attributes {stable_mosaic.version = 11 : i64} {
  func.func @conv_stats_kernel(%arg0: i32, %arg1: memref<256x36xbf16, #tpu.memory_space<vmem>>, %arg2: memref<36x8xbf16, #tpu.memory_space<vmem>>, %arg3: memref<256x8xf32, #tpu.memory_space<vmem>>, %arg4: memref<1x2x8xf32, #tpu.memory_space<vmem>>) attributes {dimension_semantics = [#tpu.dimension_semantics<parallel>], iteration_bounds = array<i64: 3>, scalar_prefetch = 0 : i64, scratch_operands = 0 : i64, tpu.core_type = #tpu.core_type<tc>, window_params = [{transform_indices = @transform_0, window_bounds = array<i64: 256, 36>}, {pipeline_mode = #tpu.pipeline_mode<synchronous>, transform_indices = @transform_1, window_bounds = array<i64: 36, 8>}, {transform_indices = @transform_2, window_bounds = array<i64: 256, 8>}, {transform_indices = @transform_3, window_bounds = array<i64: 1, 2, 8>}]} {
    %c0 = arith.constant 0 : index
    %c0_0 = arith.constant 0 : index
    %0 = vector.load %arg1[%c0, %c0_0] : memref<256x36xbf16, #tpu.memory_space<vmem>>, vector<256x36xbf16>
    %c0_1 = arith.constant 0 : index
    %c0_2 = arith.constant 0 : index
    %1 = vector.load %arg2[%c0_1, %c0_2] : memref<36x8xbf16, #tpu.memory_space<vmem>>, vector<36x8xbf16>
    %cst = arith.constant dense<0.000000e+00> : vector<256x8xf32>
    %2 = tpu.matmul %0, %1, %cst {dimension_numbers = #tpu.dot_dimension_numbers<[1], [0], [0], [1], [0, 0, 1, 1], [], []>} : vector<256x36xbf16>, vector<36x8xbf16>, vector<256x8xf32> -> vector<256x8xf32>
    %c0_3 = arith.constant 0 : index
    %c0_4 = arith.constant 0 : index
    %3 = vector.load %arg3[%c0_3, %c0_4] : memref<256x8xf32, #tpu.memory_space<vmem>>, vector<256x8xf32>
    tpu.vector_store %arg3[%c0_3, %c0_4], %2 {strides = array<i32>} : memref<256x8xf32, #tpu.memory_space<vmem>>, vector<256x8xf32>,
    %c256_i32 = arith.constant 256 : i32
    %4 = arith.muli %arg0, %c256_i32 : i32
    %c648_i32 = arith.constant 648 : i32
    %5 = arith.subi %c648_i32, %4 : i32
    %c256_i32_5 = arith.constant 256 : i32
    %6 = arith.minsi %c256_i32_5, %5 : i32
    %7 = arith.sitofp %6 : i32 to f32
    %cst_6 = arith.constant dense<0.000000e+00> : vector<8xf32>
    %8 = vector.multi_reduction <add>, %2, %cst_6 [0] : vector<256x8xf32> to vector<8xf32>
    %9 = vector.shape_cast %8 : vector<8xf32> to vector<1x8xf32>
    %10 = vector.broadcast %7 : f32 to vector<1x8xf32>
    %11 = arith.divf %9, %10 : vector<1x8xf32>
    %12 = tpu.iota {dimensions = array<i32: 0>} : vector<256x1xi32>
    %c256_i32_7 = arith.constant 256 : i32
    %13 = arith.muli %arg0, %c256_i32_7 : i32
    %14 = vector.broadcast %13 : i32 to vector<256x1xi32>
    %15 = arith.addi %12, %14 : vector<256x1xi32>
    %c648_i32_8 = arith.constant 648 : i32
    %16 = vector.broadcast %c648_i32_8 : i32 to vector<256x1xi32>
    %17 = arith.cmpi slt, %15, %16 : vector<256x1xi32>
    %18 = vector.broadcast %11 : vector<1x8xf32> to vector<256x8xf32>
    %19 = arith.subf %2, %18 : vector<256x8xf32>
    %cst_9 = arith.constant 0.000000e+00 : f32
    %20 = vector.shape_cast %17 : vector<256x1xi1> to vector<256x1xi1>
    %21 = vector.broadcast %20 : vector<256x1xi1> to vector<256x8xi1>
    %22 = vector.broadcast %cst_9 : f32 to vector<256x8xf32>
    %23 = arith.select %21, %19, %22 : vector<256x8xi1>, vector<256x8xf32>
    %24 = arith.mulf %23, %23 : vector<256x8xf32>
    %cst_10 = arith.constant dense<0.000000e+00> : vector<8xf32>
    %25 = vector.multi_reduction <add>, %24, %cst_10 [0] : vector<256x8xf32> to vector<8xf32>
    %26 = vector.shape_cast %25 : vector<8xf32> to vector<1x8xf32>
    %27 = tpu.concatenate %9, %26 in 0 : vector<1x8xf32>, vector<1x8xf32> -> vector<2x8xf32>
    %c0_11 = arith.constant 0 : index
    %c0_12 = arith.constant 0 : index
    %c0_13 = arith.constant 0 : index
    %28 = vector.load %arg4[%c0_11, %c0_12, %c0_13] : memref<1x2x8xf32, #tpu.memory_space<vmem>>, vector<1x2x8xf32>
    %29 = vector.shape_cast %28 : vector<1x2x8xf32> to vector<2x8xf32>
    %30 = vector.shape_cast %27 : vector<2x8xf32> to vector<1x2x8xf32>
    tpu.vector_store %arg4[%c0_11, %c0_12, %c0_13], %30 {strides = array<i32>} : memref<1x2x8xf32, #tpu.memory_space<vmem>>, vector<1x2x8xf32>,
    return
  }
  func.func @transform_0(%arg0: i32) -> (i32, i32) {
    %c0_i32 = arith.constant 0 : i32
    %c0_i32_0 = arith.constant 0 : i32
    return %arg0, %c0_i32 : i32, i32
  }
  func.func @transform_1(%arg0: i32) -> (i32, i32) {
    %c0_i32 = arith.constant 0 : i32
    %c0_i32_0 = arith.constant 0 : i32
    %c0_i32_1 = arith.constant 0 : i32
    return %c0_i32, %c0_i32_0 : i32, i32
  }
  func.func @transform_2(%arg0: i32) -> (i32, i32) {
    %c0_i32 = arith.constant 0 : i32
    %c0_i32_0 = arith.constant 0 : i32
    return %arg0, %c0_i32 : i32, i32
  }
  func.func @transform_3(%arg0: i32) -> (i32, i32, i32) {
    %c0_i32 = arith.constant 0 : i32
    %c0_i32_0 = arith.constant 0 : i32
    %c0_i32_1 = arith.constant 0 : i32
    return %arg0, %c0_i32, %c0_i32_0 : i32, i32, i32
  }
}

module attributes {stable_mosaic.version = 11 : i64} {
  func.func @norm_kernel(%arg0: i32, %arg1: memref<256x8xf32, #tpu.memory_space<vmem>>, %arg2: memref<2x8xf32, #tpu.memory_space<vmem>>, %arg3: memref<256x8xf32, #tpu.memory_space<vmem>>) attributes {dimension_semantics = [#tpu.dimension_semantics<parallel>], iteration_bounds = array<i64: 3>, scalar_prefetch = 0 : i64, scratch_operands = 0 : i64, tpu.core_type = #tpu.core_type<tc>, window_params = [{transform_indices = @transform_0, window_bounds = array<i64: 256, 8>}, {pipeline_mode = #tpu.pipeline_mode<synchronous>, transform_indices = @transform_1, window_bounds = array<i64: 2, 8>}, {transform_indices = @transform_2, window_bounds = array<i64: 256, 8>}]} {
    %c0 = arith.constant 0 : index
    %c0_0 = arith.constant 0 : index
    %0 = vector.load %arg1[%c0, %c0_0] : memref<256x8xf32, #tpu.memory_space<vmem>>, vector<256x8xf32>
    %c0_1 = arith.constant 0 : index
    %c0_2 = arith.constant 0 : index
    %1 = vector.load %arg2[%c0_1, %c0_2] : memref<2x8xf32, #tpu.memory_space<vmem>>, vector<1x8xf32>
    %2 = vector.broadcast %1 : vector<1x8xf32> to vector<256x8xf32>
    %3 = arith.mulf %0, %2 : vector<256x8xf32>
    %c1 = arith.constant 1 : index
    %c0_3 = arith.constant 0 : index
    %4 = vector.load %arg2[%c1, %c0_3] : memref<2x8xf32, #tpu.memory_space<vmem>>, vector<1x8xf32>
    %5 = vector.broadcast %4 : vector<1x8xf32> to vector<256x8xf32>
    %6 = arith.addf %3, %5 : vector<256x8xf32>
    %cst = arith.constant 0.00999999977 : f32
    %7 = vector.broadcast %cst : f32 to vector<256x8xf32>
    %8 = arith.mulf %7, %6 : vector<256x8xf32>
    %9 = arith.maximumf %6, %8 : vector<256x8xf32>
    %c0_4 = arith.constant 0 : index
    %c0_5 = arith.constant 0 : index
    %10 = vector.load %arg3[%c0_4, %c0_5] : memref<256x8xf32, #tpu.memory_space<vmem>>, vector<256x8xf32>
    tpu.vector_store %arg3[%c0_4, %c0_5], %9 {strides = array<i32>} : memref<256x8xf32, #tpu.memory_space<vmem>>, vector<256x8xf32>,
    return
  }
  func.func @transform_0(%arg0: i32) -> (i32, i32) {
    %c0_i32 = arith.constant 0 : i32
    %c0_i32_0 = arith.constant 0 : i32
    return %arg0, %c0_i32 : i32, i32
  }
  func.func @transform_1(%arg0: i32) -> (i32, i32) {
    %c0_i32 = arith.constant 0 : i32
    %c0_i32_0 = arith.constant 0 : i32
    %c0_i32_1 = arith.constant 0 : i32
    return %c0_i32, %c0_i32_0 : i32, i32
  }
  func.func @transform_2(%arg0: i32) -> (i32, i32) {
    %c0_i32 = arith.constant 0 : i32
    %c0_i32_0 = arith.constant 0 : i32
    return %arg0, %c0_i32 : i32, i32
  }
}

</mosaic_0001>

<llo_original>
// kernel: up_forward.3
$region0: #{up_forward.3}
  #allocation0 [shape = 'u32[]', space=smem, size = 0x4, offset = 0x4, fixed_abs, tag = 'smem constant byte address 0x4 - core index']
  #allocation1 [shape = 'u32[144,128]{1,0:T(1,128)}', space=vmem, size = 0x12000, scoped, tag = 'internal scratch']
  %s0 = inlined_call_operand.vmem [shape: f32[768,8], index: 0, kind: input, shape index: {}, may-alias: {0,2}]
  %s1 = inlined_call_operand.vmem [shape: f32[2,8], index: 1, kind: input, shape index: {}]
  %s2 = inlined_call_operand.vmem [shape: f32[768,8], index: 2, kind: output, shape index: {}, may-alias: {0,2}]
  %s3 = sld [smem:[#allocation0]]
  $region41: #{up_forward.3} parent=0
    _
  %s5 = ssub.s32 1, %s3
  %s6 = scalar_select 0, %s5, %s3
  loop: start=0, step=1, limit=5
  $region2: #{up_forward.3} parent=0 // loop_pre_header
    _
  $region3: #{up_forward.3} parent=0 // loop_header
    %s8 = sphi 0, %s12
    %p9 = scmp.ge.s32.totalorder %s8, 5
    %s18 = sphi 0, %s20
    %s21 = sphi 0, %s18
    %s22 = sphi 0, %s21
    %s38 = sphi 0, %s22
    %s42 = sphi 0, %s42
    %s44 = sphi 0, %s42
    %s45 = sphi 0, %s44
    %s59 = sphi 0, %s45
    %s65 = sphi 0, %s67
    %s68 = sphi 0, %s65
    %s69 = sphi 0, %s68
    %s85 = sphi 0, %s69
  $region4: #{up_forward.3} parent=0 // loop_header_branch
    %11 = sbr.rel (%p9) target = $region8
  $region5: #{up_forward.3} parent=0 // loop_body
    %s13 = ssub.s32 %s8, 1
    %s14 = ssub.s32 %s8, 2
    %s15 = sadd.s32 %s8, 1
    %s16 = ssub.s32 %s8, %s15
    %p17 = scmp.eq.s32.totalorder %s16, 0
    %s19 = sadd.s32 %s18, 1
    %s20 = scalar_select %p17, %s18, %s19
    %p23 = pneg %p17
    %p24 = scmp.eq.s32.totalorder %s8, 2
    %p25 = por %p23, %p24
    %p26 = scmp.ne.s32.totalorder %s18, %s21
    %p27 = scmp.eq.s32.totalorder %s8, 0
    %p28 = por %p26, %p27
    %p29 = scmp.ne.s32.totalorder %s18, %s21
    %p30 = scmp.eq.s32.totalorder %s13, 2
    %p31 = por %p29, %p30
    %p32 = scmp.ne.s32.totalorder %s21, %s22
    %p33 = scmp.eq.s32.totalorder %s13, 0
    %p34 = por %p32, %p33
    %p35 = scmp.ne.s32.totalorder %s21, %s22
    %p36 = scmp.eq.s32.totalorder %s14, 2
    %p37 = por %p35, %p36
    %p39 = scmp.ne.s32.totalorder %s22, %s38
    %p40 = scmp.eq.s32.totalorder %s14, 0
    %p41 = por %p39, %p40
    %s43 = sadd.s32 %s42, 1
    %p46 = scmp.eq.s32.totalorder %s8, 2
    %p47 = scmp.ne.s32.totalorder %s42, %s44
    %p48 = scmp.eq.s32.totalorder %s8, 0
    %p49 = por %p47, %p48
    %p50 = scmp.ne.s32.totalorder %s42, %s44
    %p51 = scmp.eq.s32.totalorder %s13, 2
    %p52 = por %p50, %p51
    %p53 = scmp.ne.s32.totalorder %s44, %s45
    %p54 = scmp.eq.s32.totalorder %s13, 0
    %p55 = por %p53, %p54
    %p56 = scmp.ne.s32.totalorder %s44, %s45
    %p57 = scmp.eq.s32.totalorder %s14, 2
    %p58 = por %p56, %p57
    %p60 = scmp.ne.s32.totalorder %s45, %s59
    %p61 = scmp.eq.s32.totalorder %s14, 0
    %p62 = por %p60, %p61
    %s63 = ssub.s32 %s8, %s15
    %p64 = scmp.eq.s32.totalorder %s63, 0
    %s66 = sadd.s32 %s65, 1
    %s67 = scalar_select %p64, %s65, %s66
    %p70 = pneg %p64
    %p71 = scmp.eq.s32.totalorder %s8, 2
    %p72 = por %p70, %p71
    %p73 = scmp.ne.s32.totalorder %s65, %s68
    %p74 = scmp.eq.s32.totalorder %s8, 0
    %p75 = por %p73, %p74
    %p76 = scmp.ne.s32.totalorder %s65, %s68
    %p77 = scmp.eq.s32.totalorder %s13, 2
    %p78 = por %p76, %p77
    %p79 = scmp.ne.s32.totalorder %s68, %s69
    %p80 = scmp.eq.s32.totalorder %s13, 0
    %p81 = por %p79, %p80
    %p82 = scmp.ne.s32.totalorder %s68, %s69
    %p83 = scmp.eq.s32.totalorder %s14, 2
    %p84 = por %p82, %p83
    %p86 = scmp.ne.s32.totalorder %s69, %s85
    %p87 = scmp.eq.s32.totalorder %s14, 0
    %p88 = por %p86, %p87
    %p89 = scmp.le.s32.totalorder 1, %s8
    %p90 = scmp.lt.s32.totalorder %s8, 4
    %p91 = pnand %p89, %p90
    %p92 = pneg %p91
    // Predicated region
    $region9: #{up_forward.3} parent=5 // pred_check
      _
    $region10: #{up_forward.3} parent=5 // pred_check_branch
      %94 = sbr.rel (%p91) target = $region12
    $region11: #{up_forward.3} parent=5 // pred_region
      %s95 = ssub.s32 %s8, 1
      // Predicated region
      $region13: #{up_forward.3} parent=11 // pred_check
        %p96 = pneg %p55
      $region14: #{up_forward.3} parent=11 // pred_check_branch
        %98 = sbr.rel (%p96) target = $region16
      $region15: #{up_forward.3} parent=11 // pred_region
        _
      $region16: #{up_forward.3} parent=11 // pred_fallthru
        _
    $region12: #{up_forward.3} parent=5 // pred_fallthru
      _
    %p99 = scmp.lt.s32.totalorder %s8, 3
    // Predicated region
    $region17: #{up_forward.3} parent=5 // pred_check
      %p100 = pneg %p99
    $region18: #{up_forward.3} parent=5 // pred_check_branch
      %102 = sbr.rel (%p100) target = $region20
    $region19: #{up_forward.3} parent=5 // pred_region
      // Predicated region
      $region21: #{up_forward.3} parent=19 // pred_check
        %p103 = pneg %p28
      $region22: #{up_forward.3} parent=19 // pred_check_branch
        %105 = sbr.rel (%p103) target = $region24
      $region23: #{up_forward.3} parent=19 // pred_region
        %s106 = smul.u32 32, %s8
        %p107 = scmp.lt.s32.totalorder %s106, 95
        %s108 = scalar_select %p107, %s106, 95
        %s109 = smul.addr %s108, 8
        %s110 = scalar_lea.vmem %s0, %s109
        %s111 = smul.u32 32, %s8
      $region24: #{up_forward.3} parent=19 // pred_fallthru
        _
    $region20: #{up_forward.3} parent=5 // pred_fallthru
      _
    %p112 = scmp.le.s32.totalorder 1, %s8
    %p113 = scmp.lt.s32.totalorder %s8, 4
    %p114 = pnand %p112, %p113
    %p115 = pneg %p114
    // Predicated region
    $region25: #{up_forward.3} parent=5 // pred_check
      _
    $region26: #{up_forward.3} parent=5 // pred_check_branch
      %117 = sbr.rel (%p114) target = $region28
    $region27: #{up_forward.3} parent=5 // pred_region
      %s118 = ssub.s32 %s8, 1
      %s119 = smul.u32 32, %s13
      %p120 = scmp.lt.s32.totalorder %s119, 95
      %s121 = scalar_select %p120, %s119, 95
      %s122 = smul.addr %s121, 8
      %s123 = scalar_lea.vmem %s0, %s122
      %p124 = pneg %p34
      %p125 = pneg %p31
      %p126 = pneg %p55
      %p127 = pneg %p52
      %p128 = pneg %p81
      %p129 = pneg %p78
      %s130 = smul.u32 32, %s13
      %p131 = scmp.lt.s32.totalorder %s130, 95
      %s132 = scalar_select %p131, %s130, 95
      %s133 = smul.addr %s132, 8
      %s134 = scalar_lea.vmem %s2, %s133
      %s135 = smul.u32 32, %s13
      %p136 = scmp.lt.s32.totalorder %s135, 95
      %s137 = scalar_select %p136, %s135, 95
      %s138 = smul.addr %s137, 8
      %s139 = scalar_lea.vmem %s0, %s138
      %s140 = smul.u32 32, %s13
      %s141 = smul.u32 32, %s13
      %p142 = scmp.lt.s32.totalorder %s141, 95
      %s143 = scalar_select %p142, %s141, 95
      %s144 = smul.addr %s143, 8
      %s145 = scalar_lea.vmem %s2, %s144
      %s146 = smul.u32 32, %s13
      %v147 = vld [vmem:[%s139] sm:$0xff]
      %v148 = vld [vmem:[%s139 + $0x8] sm:$0xff]
      %v149 = vld [vmem:[%s139 + $0x10] sm:$0xff]
      %v150 = vld [vmem:[%s139 + $0x18] sm:$0xff]
      %v151 = vld [vmem:[%s139 + $0x20] sm:$0xff]
      %v152 = vld [vmem:[%s139 + $0x28] sm:$0xff]
      %v153 = vld [vmem:[%s139 + $0x30] sm:$0xff]
      %v154 = vld [vmem:[%s139 + $0x38] sm:$0xff]
      %v155 = vld [vmem:[%s139 + $0x40] sm:$0xff]
      %v156 = vld [vmem:[%s139 + $0x48] sm:$0xff]
      %v157 = vld [vmem:[%s139 + $0x50] sm:$0xff]
      %v158 = vld [vmem:[%s139 + $0x58] sm:$0xff]
      %v159 = vld [vmem:[%s139 + $0x60] sm:$0xff]
      %v160 = vld [vmem:[%s139 + $0x68] sm:$0xff]
      %v161 = vld [vmem:[%s139 + $0x70] sm:$0xff]
      %v162 = vld [vmem:[%s139 + $0x78] sm:$0xff]
      %v163 = vld [vmem:[%s139 + $0x80] sm:$0xff]
      %v164 = vld [vmem:[%s139 + $0x88] sm:$0xff]
      %v165 = vld [vmem:[%s139 + $0x90] sm:$0xff]
      %v166 = vld [vmem:[%s139 + $0x98] sm:$0xff]
      %v167 = vld [vmem:[%s139 + $0xa0] sm:$0xff]
      %v168 = vld [vmem:[%s139 + $0xa8] sm:$0xff]
      %v169 = vld [vmem:[%s139 + $0xb0] sm:$0xff]
      %v170 = vld [vmem:[%s139 + $0xb8] sm:$0xff]
      %v171 = vld [vmem:[%s139 + $0xc0] sm:$0xff]
      %v172 = vld [vmem:[%s139 + $0xc8] sm:$0xff]
      %v173 = vld [vmem:[%s139 + $0xd0] sm:$0xff]
      %v174 = vld [vmem:[%s139 + $0xd8] sm:$0xff]
      %v175 = vld [vmem:[%s139 + $0xe0] sm:$0xff]
      %v176 = vld [vmem:[%s139 + $0xe8] sm:$0xff]
      %v177 = vld [vmem:[%s139 + $0xf0] sm:$0xff]
      %v178 = vld [vmem:[%s139 + $0xf8] sm:$0xff]
      %v179 = vld [vmem:[%s1] sm:$0x1]
      %v180 = vlaneseq
      %v181 = vshrl.u32 %v180, 7
      %v182 = vsub.s32 0, %v181
      %v183 = vrot.slane %v179, %v182
      %v184 = vmul.f32 %v147, %v183
      %v185 = vmul.f32 %v148, %v183
      %v186 = vmul.f32 %v149, %v183
      %v187 = vmul.f32 %v150, %v183
      %v188 = vmul.f32 %v151, %v183
      %v189 = vmul.f32 %v152, %v183
      %v190 = vmul.f32 %v153, %v183
      %v191 = vmul.f32 %v154, %v183
      %v192 = vmul.f32 %v155, %v183
      %v193 = vmul.f32 %v156, %v183
      %v194 = vmul.f32 %v157, %v183
      %v195 = vmul.f32 %v158, %v183
      %v196 = vmul.f32 %v159, %v183
      %v197 = vmul.f32 %v160, %v183
      %v198 = vmul.f32 %v161, %v183
      %v199 = vmul.f32 %v162, %v183
      %v200 = vmul.f32 %v163, %v183
      %v201 = vmul.f32 %v164, %v183
      %v202 = vmul.f32 %v165, %v183
      %v203 = vmul.f32 %v166, %v183
      %v204 = vmul.f32 %v167, %v183
      %v205 = vmul.f32 %v168, %v183
      %v206 = vmul.f32 %v169, %v183
      %v207 = vmul.f32 %v170, %v183
      %v208 = vmul.f32 %v171, %v183
      %v209 = vmul.f32 %v172, %v183
      %v210 = vmul.f32 %v173, %v183
      %v211 = vmul.f32 %v174, %v183
      %v212 = vmul.f32 %v175, %v183
      %v213 = vmul.f32 %v176, %v183
      %v214 = vmul.f32 %v177, %v183
      %v215 = vmul.f32 %v178, %v183
      %v216 = vld [vmem:[%s1 + $0x1] sm:$0x1]
      %v217 = vlaneseq
      %v218 = vshrl.u32 %v217, 7
      %v219 = vsub.s32 0, %v218
      %v220 = vrot.slane %v216, %v219
      %v221 = vadd.f32 %v184, %v220
      %v222 = vadd.f32 %v185, %v220
      %v223 = vadd.f32 %v186, %v220
      %v224 = vadd.f32 %v187, %v220
      %v225 = vadd.f32 %v188, %v220
      %v226 = vadd.f32 %v189, %v220
      %v227 = vadd.f32 %v190, %v220
      %v228 = vadd.f32 %v191, %v220
      %v229 = vadd.f32 %v192, %v220
      %v230 = vadd.f32 %v193, %v220
      %v231 = vadd.f32 %v194, %v220
      %v232 = vadd.f32 %v195, %v220
      %v233 = vadd.f32 %v196, %v220
      %v234 = vadd.f32 %v197, %v220
      %v235 = vadd.f32 %v198, %v220
      %v236 = vadd.f32 %v199, %v220
      %v237 = vadd.f32 %v200, %v220
      %v238 = vadd.f32 %v201, %v220
      %v239 = vadd.f32 %v202, %v220
      %v240 = vadd.f32 %v203, %v220
      %v241 = vadd.f32 %v204, %v220
      %v242 = vadd.f32 %v205, %v220
      %v243 = vadd.f32 %v206, %v220
      %v244 = vadd.f32 %v207, %v220
      %v245 = vadd.f32 %v208, %v220
      %v246 = vadd.f32 %v209, %v220
      %v247 = vadd.f32 %v210, %v220
      %v248 = vadd.f32 %v211, %v220
      %v249 = vadd.f32 %v212, %v220
      %v250 = vadd.f32 %v213, %v220
      %v251 = vadd.f32 %v214, %v220
      %v252 = vadd.f32 %v215, %v220
      %v253 = vmul.f32 %v221, 0.01
      %v254 = vmul.f32 %v222, 0.01
      %v255 = vmul.f32 %v223, 0.01
      %v256 = vmul.f32 %v224, 0.01
      %v257 = vmul.f32 %v225, 0.01
      %v258 = vmul.f32 %v226, 0.01
      %v259 = vmul.f32 %v227, 0.01
      %v260 = vmul.f32 %v228, 0.01
      %v261 = vmul.f32 %v229, 0.01
      %v262 = vmul.f32 %v230, 0.01
      %v263 = vmul.f32 %v231, 0.01
      %v264 = vmul.f32 %v232, 0.01
      %v265 = vmul.f32 %v233, 0.01
      %v266 = vmul.f32 %v234, 0.01
      %v267 = vmul.f32 %v235, 0.01
      %v268 = vmul.f32 %v236, 0.01
      %v269 = vmul.f32 %v237, 0.01
      %v270 = vmul.f32 %v238, 0.01
      %v271 = vmul.f32 %v239, 0.01
      %v272 = vmul.f32 %v240, 0.01
      %v273 = vmul.f32 %v241, 0.01
      %v274 = vmul.f32 %v242, 0.01
      %v275 = vmul.f32 %v243, 0.01
      %v276 = vmul.f32 %v244, 0.01
      %v277 = vmul.f32 %v245, 0.01
      %v278 = vmul.f32 %v246, 0.01
      %v279 = vmul.f32 %v247, 0.01
      %v280 = vmul.f32 %v248, 0.01
      %v281 = vmul.f32 %v249, 0.01
      %v282 = vmul.f32 %v250, 0.01
      %v283 = vmul.f32 %v251, 0.01
      %v284 = vmul.f32 %v252, 0.01
      %v285 = vmax.f32 %v221, %v253
      %v286 = vmax.f32 %v222, %v254
      %v287 = vmax.f32 %v223, %v255
      %v288 = vmax.f32 %v224, %v256
      %v289 = vmax.f32 %v225, %v257
      %v290 = vmax.f32 %v226, %v258
      %v291 = vmax.f32 %v227, %v259
      %v292 = vmax.f32 %v228, %v260
      %v293 = vmax.f32 %v229, %v261
      %v294 = vmax.f32 %v230, %v262
      %v295 = vmax.f32 %v231, %v263
      %v296 = vmax.f32 %v232, %v264
      %v297 = vmax.f32 %v233, %v265
      %v298 = vmax.f32 %v234, %v266
      %v299 = vmax.f32 %v235, %v267
      %v300 = vmax.f32 %v236, %v268
      %v301 = vmax.f32 %v237, %v269
      %v302 = vmax.f32 %v238, %v270
      %v303 = vmax.f32 %v239, %v271
      %v304 = vmax.f32 %v240, %v272
      %v305 = vmax.f32 %v241, %v273
      %v306 = vmax.f32 %v242, %v274
      %v307 = vmax.f32 %v243, %v275
      %v308 = vmax.f32 %v244, %v276
      %v309 = vmax.f32 %v245, %v277
      %v310 = vmax.f32 %v246, %v278
      %v311 = vmax.f32 %v247, %v279
      %v312 = vmax.f32 %v248, %v280
      %v313 = vmax.f32 %v249, %v281
      %v314 = vmax.f32 %v250, %v282
      %v315 = vmax.f32 %v251, %v283
      %v316 = vmax.f32 %v252, %v284
      %vm317 = vcmask 64512
      %318 = vst.msk [vmem:[%s145] sm:$0xff] %vm317, %v285
      %319 = vst.msk [vmem:[%s145 + $0x8] sm:$0xff] %vm317, %v286
      %320 = vst.msk [vmem:[%s145 + $0x10] sm:$0xff] %vm317, %v287
      %321 = vst.msk [vmem:[%s145 + $0x18] sm:$0xff] %vm317, %v288
      %322 = vst.msk [vmem:[%s145 + $0x20] sm:$0xff] %vm317, %v289
      %323 = vst.msk [vmem:[%s145 + $0x28] sm:$0xff] %vm317, %v290
      %324 = vst.msk [vmem:[%s145 + $0x30] sm:$0xff] %vm317, %v291
      %325 = vst.msk [vmem:[%s145 + $0x38] sm:$0xff] %vm317, %v292
      %326 = vst.msk [vmem:[%s145 + $0x40] sm:$0xff] %vm317, %v293
      %327 = vst.msk [vmem:[%s145 + $0x48] sm:$0xff] %vm317, %v294
      %328 = vst.msk [vmem:[%s145 + $0x50] sm:$0xff] %vm317, %v295
      %329 = vst.msk [vmem:[%s145 + $0x58] sm:$0xff] %vm317, %v296
      %330 = vst.msk [vmem:[%s145 + $0x60] sm:$0xff] %vm317, %v297
      %331 = vst.msk [vmem:[%s145 + $0x68] sm:$0xff] %vm317, %v298
      %332 = vst.msk [vmem:[%s145 + $0x70] sm:$0xff] %vm317, %v299
      %333 = vst.msk [vmem:[%s145 + $0x78] sm:$0xff] %vm317, %v300
      %334 = vst.msk [vmem:[%s145 + $0x80] sm:$0xff] %vm317, %v301
      %335 = vst.msk [vmem:[%s145 + $0x88] sm:$0xff] %vm317, %v302
      %336 = vst.msk [vmem:[%s145 + $0x90] sm:$0xff] %vm317, %v303
      %337 = vst.msk [vmem:[%s145 + $0x98] sm:$0xff] %vm317, %v304
      %338 = vst.msk [vmem:[%s145 + $0xa0] sm:$0xff] %vm317, %v305
      %339 = vst.msk [vmem:[%s145 + $0xa8] sm:$0xff] %vm317, %v306
      %340 = vst.msk [vmem:[%s145 + $0xb0] sm:$0xff] %vm317, %v307
      %341 = vst.msk [vmem:[%s145 + $0xb8] sm:$0xff] %vm317, %v308
      %342 = vst.msk [vmem:[%s145 + $0xc0] sm:$0xff] %vm317, %v309
      %343 = vst.msk [vmem:[%s145 + $0xc8] sm:$0xff] %vm317, %v310
      %344 = vst.msk [vmem:[%s145 + $0xd0] sm:$0xff] %vm317, %v311
      %345 = vst.msk [vmem:[%s145 + $0xd8] sm:$0xff] %vm317, %v312
      %346 = vst.msk [vmem:[%s145 + $0xe0] sm:$0xff] %vm317, %v313
      %347 = vst.msk [vmem:[%s145 + $0xe8] sm:$0xff] %vm317, %v314
      %348 = vst.msk [vmem:[%s145 + $0xf0] sm:$0xff] %vm317, %v315
      %349 = vst.msk [vmem:[%s145 + $0xf8] sm:$0xff] %vm317, %v316
      %s350 = smul.u32 32, %s13
      %p351 = scmp.lt.s32.totalorder %s350, 95
      %s352 = scalar_select %p351, %s350, 95
      %s353 = smul.addr %s352, 8
      %s354 = scalar_lea.vmem %s2, %s353
      // Predicated region
      $region29: #{up_forward.3} parent=27 // pred_check
        %p355 = pneg %p78
      $region30: #{up_forward.3} parent=27 // pred_check_branch
        %357 = sbr.rel (%p355) target = $region32
      $region31: #{up_forward.3} parent=27 // pred_region
        %s358 = smul.u32 32, %s13
      $region32: #{up_forward.3} parent=27 // pred_fallthru
        _
    $region28: #{up_forward.3} parent=5 // pred_fallthru
      _
    %p359 = scmp.le.s32.totalorder 2, %s8
    // Predicated region
    $region33: #{up_forward.3} parent=5 // pred_check
      %p360 = pneg %p359
    $region34: #{up_forward.3} parent=5 // pred_check_branch
      %362 = sbr.rel (%p360) target = $region36
    $region35: #{up_forward.3} parent=5 // pred_region
      %s363 = ssub.s32 %s8, 2
      // Predicated region
      $region37: #{up_forward.3} parent=35 // pred_check
        %p364 = pneg %p84
      $region38: #{up_forward.3} parent=35 // pred_check_branch
        %366 = sbr.rel (%p364) target = $region40
      $region39: #{up_forward.3} parent=35 // pred_region
        %s367 = smul.u32 32, %s14
        %p368 = scmp.lt.s32.totalorder %s367, 95
        %s369 = scalar_select %p368, %s367, 95
        %s370 = smul.addr %s369, 8
        %s371 = scalar_lea.vmem %s2, %s370
      $region40: #{up_forward.3} parent=35 // pred_fallthru
        _
    $region36: #{up_forward.3} parent=5 // pred_fallthru
      _
  $region6: #{up_forward.3} parent=0 // loop_footer
    %s12 = sadd.s32 1, %s8
  $region7: #{up_forward.3} parent=0 // loop_footer_branch
    %7 = sbr.rel target = $region3
  $region8: #{up_forward.3} parent=0 // loop_exit
    _

// kernel: up_forward.2
$region0: #{up_forward.2}
  #allocation0 [shape = 'u32[]', space=smem, size = 0x4, offset = 0x4, fixed_abs, tag = 'smem constant byte address 0x4 - core index']
  #allocation1 [shape = 'u32[144,128]{1,0:T(1,128)}', space=vmem, size = 0x12000, scoped, tag = 'internal scratch']
  %s0 = inlined_call_operand.vmem [shape: bf16[768,36], index: 0, kind: input, shape index: {}]
  %s1 = inlined_call_operand.vmem [shape: bf16[36,8], index: 1, kind: input, shape index: {}]
  %s2 = inlined_call_operand.vmem [shape: f32[768,8], index: 2, kind: output, shape index: {0}]
  %s3 = inlined_call_operand.vmem [shape: f32[3,2,8], index: 3, kind: output, shape index: {1}]
  %4 = xla_tuple %s2, %s3
  %s5 = sld [smem:[#allocation0]]
  $region49: #{up_forward.2} parent=0
    _
  %s7 = ssub.s32 1, %s5
  %s8 = scalar_select 0, %s7, %s5
  loop: start=0, step=1, limit=5
  $region2: #{up_forward.2} parent=0 // loop_pre_header
    _
  $region3: #{up_forward.2} parent=0 // loop_header
    %s10 = sphi 0, %s14
    %p11 = scmp.ge.s32.totalorder %s10, 5
    %s20 = sphi 0, %s22
    %s23 = sphi 0, %s20
    %s24 = sphi 0, %s23
    %s40 = sphi 0, %s24
    %s44 = sphi 0, %s44
    %s46 = sphi 0, %s44
    %s47 = sphi 0, %s46
    %s61 = sphi 0, %s47
    %s67 = sphi 0, %s69
    %s70 = sphi 0, %s67
    %s71 = sphi 0, %s70
    %s87 = sphi 0, %s71
    %s93 = sphi 0, %s95
    %s96 = sphi 0, %s93
    %s97 = sphi 0, %s96
    %s113 = sphi 0, %s97
  $region4: #{up_forward.2} parent=0 // loop_header_branch
    %13 = sbr.rel (%p11) target = $region8
  $region5: #{up_forward.2} parent=0 // loop_body
    %s15 = ssub.s32 %s10, 1
    %s16 = ssub.s32 %s10, 2
    %s17 = sadd.s32 %s10, 1
    %s18 = ssub.s32 %s10, %s17
    %p19 = scmp.eq.s32.totalorder %s18, 0
    %s21 = sadd.s32 %s20, 1
    %s22 = scalar_select %p19, %s20, %s21
    %p25 = pneg %p19
    %p26 = scmp.eq.s32.totalorder %s10, 2
    %p27 = por %p25, %p26
    %p28 = scmp.ne.s32.totalorder %s20, %s23
    %p29 = scmp.eq.s32.totalorder %s10, 0
    %p30 = por %p28, %p29
    %p31 = scmp.ne.s32.totalorder %s20, %s23
    %p32 = scmp.eq.s32.totalorder %s15, 2
    %p33 = por %p31, %p32
    %p34 = scmp.ne.s32.totalorder %s23, %s24
    %p35 = scmp.eq.s32.totalorder %s15, 0
    %p36 = por %p34, %p35
    %p37 = scmp.ne.s32.totalorder %s23, %s24
    %p38 = scmp.eq.s32.totalorder %s16, 2
    %p39 = por %p37, %p38
    %p41 = scmp.ne.s32.totalorder %s24, %s40
    %p42 = scmp.eq.s32.totalorder %s16, 0
    %p43 = por %p41, %p42
    %s45 = sadd.s32 %s44, 1
    %p48 = scmp.eq.s32.totalorder %s10, 2
    %p49 = scmp.ne.s32.totalorder %s44, %s46
    %p50 = scmp.eq.s32.totalorder %s10, 0
    %p51 = por %p49, %p50
    %p52 = scmp.ne.s32.totalorder %s44, %s46
    %p53 = scmp.eq.s32.totalorder %s15, 2
    %p54 = por %p52, %p53
    %p55 = scmp.ne.s32.totalorder %s46, %s47
    %p56 = scmp.eq.s32.totalorder %s15, 0
    %p57 = por %p55, %p56
    %p58 = scmp.ne.s32.totalorder %s46, %s47
    %p59 = scmp.eq.s32.totalorder %s16, 2
    %p60 = por %p58, %p59
    %p62 = scmp.ne.s32.totalorder %s47, %s61
    %p63 = scmp.eq.s32.totalorder %s16, 0
    %p64 = por %p62, %p63
    %s65 = ssub.s32 %s10, %s17
    %p66 = scmp.eq.s32.totalorder %s65, 0
    %s68 = sadd.s32 %s67, 1
    %s69 = scalar_select %p66, %s67, %s68
    %p72 = pneg %p66
    %p73 = scmp.eq.s32.totalorder %s10, 2
    %p74 = por %p72, %p73
    %p75 = scmp.ne.s32.totalorder %s67, %s70
    %p76 = scmp.eq.s32.totalorder %s10, 0
    %p77 = por %p75, %p76
    %p78 = scmp.ne.s32.totalorder %s67, %s70
    %p79 = scmp.eq.s32.totalorder %s15, 2
    %p80 = por %p78, %p79
    %p81 = scmp.ne.s32.totalorder %s70, %s71
    %p82 = scmp.eq.s32.totalorder %s15, 0
    %p83 = por %p81, %p82
    %p84 = scmp.ne.s32.totalorder %s70, %s71
    %p85 = scmp.eq.s32.totalorder %s16, 2
    %p86 = por %p84, %p85
    %p88 = scmp.ne.s32.totalorder %s71, %s87
    %p89 = scmp.eq.s32.totalorder %s16, 0
    %p90 = por %p88, %p89
    %s91 = ssub.s32 %s10, %s17
    %p92 = scmp.eq.s32.totalorder %s91, 0
    %s94 = sadd.s32 %s93, 1
    %s95 = scalar_select %p92, %s93, %s94
    %p98 = pneg %p92
    %p99 = scmp.eq.s32.totalorder %s10, 2
    %p100 = por %p98, %p99
    %p101 = scmp.ne.s32.totalorder %s93, %s96
    %p102 = scmp.eq.s32.totalorder %s10, 0
    %p103 = por %p101, %p102
    %p104 = scmp.ne.s32.totalorder %s93, %s96
    %p105 = scmp.eq.s32.totalorder %s15, 2
    %p106 = por %p104, %p105
    %p107 = scmp.ne.s32.totalorder %s96, %s97
    %p108 = scmp.eq.s32.totalorder %s15, 0
    %p109 = por %p107, %p108
    %p110 = scmp.ne.s32.totalorder %s96, %s97
    %p111 = scmp.eq.s32.totalorder %s16, 2
    %p112 = por %p110, %p111
    %p114 = scmp.ne.s32.totalorder %s97, %s113
    %p115 = scmp.eq.s32.totalorder %s16, 0
    %p116 = por %p114, %p115
    %p117 = scmp.le.s32.totalorder 1, %s10
    %p118 = scmp.lt.s32.totalorder %s10, 4
    %p119 = pnand %p117, %p118
    %p120 = pneg %p119
    // Predicated region
    $region9: #{up_forward.2} parent=5 // pred_check
      _
    $region10: #{up_forward.2} parent=5 // pred_check_branch
      %122 = sbr.rel (%p119) target = $region12
    $region11: #{up_forward.2} parent=5 // pred_region
      %s123 = ssub.s32 %s10, 1
      // Predicated region
      $region13: #{up_forward.2} parent=11 // pred_check
        %p124 = pneg %p57
      $region14: #{up_forward.2} parent=11 // pred_check_branch
        %126 = sbr.rel (%p124) target = $region16
      $region15: #{up_forward.2} parent=11 // pred_region
        _
      $region16: #{up_forward.2} parent=11 // pred_fallthru
        _
    $region12: #{up_forward.2} parent=5 // pred_fallthru
      _
    %p127 = scmp.lt.s32.totalorder %s10, 3
    // Predicated region
    $region17: #{up_forward.2} parent=5 // pred_check
      %p128 = pneg %p127
    $region18: #{up_forward.2} parent=5 // pred_check_branch
      %130 = sbr.rel (%p128) target = $region20
    $region19: #{up_forward.2} parent=5 // pred_region
      // Predicated region
      $region21: #{up_forward.2} parent=19 // pred_check
        %p131 = pneg %p30
      $region22: #{up_forward.2} parent=19 // pred_check_branch
        %133 = sbr.rel (%p131) target = $region24
      $region23: #{up_forward.2} parent=19 // pred_region
        %s134 = smul.u32 32, %s10
        %p135 = scmp.lt.s32.totalorder %s134, 95
        %s136 = scalar_select %p135, %s134, 95
        %s137 = smul.addr %s136, 4
        %s138 = scalar_lea.vmem %s0, %s137
        %s139 = smul.u32 32, %s10
      $region24: #{up_forward.2} parent=19 // pred_fallthru
        _
    $region20: #{up_forward.2} parent=5 // pred_fallthru
      _
    %p140 = scmp.le.s32.totalorder 1, %s10
    %p141 = scmp.lt.s32.totalorder %s10, 4
    %p142 = pnand %p140, %p141
    %p143 = pneg %p142
    // Predicated region
    $region25: #{up_forward.2} parent=5 // pred_check
      _
    $region26: #{up_forward.2} parent=5 // pred_check_branch
      %145 = sbr.rel (%p142) target = $region28
    $region27: #{up_forward.2} parent=5 // pred_region
      %s146 = ssub.s32 %s10, 1
      %s147 = smul.u32 32, %s15
      %p148 = scmp.lt.s32.totalorder %s147, 95
      %s149 = scalar_select %p148, %s147, 95
      %s150 = smul.addr %s149, 4
      %s151 = scalar_lea.vmem %s0, %s150
      %p152 = pneg %p36
      %p153 = pneg %p33
      %p154 = pneg %p57
      %p155 = pneg %p54
      %p156 = pneg %p83
      %p157 = pneg %p80
      %s158 = smul.u32 32, %s15
      %p159 = scmp.lt.s32.totalorder %s158, 95
      %s160 = scalar_select %p159, %s158, 95
      %s161 = smul.addr %s160, 8
      %s162 = scalar_lea.vmem %s2, %s161
      %p163 = pneg %p109
      %p164 = pneg %p106
      %p165 = scmp.lt.s32.totalorder %s15, 2
      %s166 = scalar_select %p165, %s15, 2
      %s167 = smul.addr %s166, 2
      %s168 = scalar_lea.vmem %s3, %s167
      %s169 = smul.u32 32, %s15
      %p170 = scmp.lt.s32.totalorder %s169, 95
      %s171 = scalar_select %p170, %s169, 95
      %s172 = smul.addr %s171, 4
      %s173 = scalar_lea.vmem %s0, %s172
      %s174 = smul.u32 32, %s15
      %s175 = smul.u32 32, %s15
      %p176 = scmp.lt.s32.totalorder %s175, 95
      %s177 = scalar_select %p176, %s175, 95
      %s178 = smul.addr %s177, 8
      %s179 = scalar_lea.vmem %s2, %s178
      %s180 = smul.u32 32, %s15
      %p181 = scmp.lt.s32.totalorder %s15, 2
      %s182 = scalar_select %p181, %s15, 2
      %s183 = smul.addr %s182, 2
      %s184 = scalar_lea.vmem %s3, %s183
      %v186 = vld [vmem:[%s173] sm:$0xf]
      %v187 = vld [vmem:[%s173 + $0x4] sm:$0xf]
      %v188 = vld [vmem:[%s173 + $0x8] sm:$0xf]
      %v189 = vld [vmem:[%s173 + $0xc] sm:$0xf]
      %v190 = vld [vmem:[%s173 + $0x10] sm:$0xf]
      %v191 = vld [vmem:[%s173 + $0x14] sm:$0xf]
      %v192 = vld [vmem:[%s173 + $0x18] sm:$0xf]
      %v193 = vld [vmem:[%s173 + $0x1c] sm:$0xf]
      %v194 = vld [vmem:[%s173 + $0x20] sm:$0xf]
      %v195 = vld [vmem:[%s173 + $0x24] sm:$0xf]
      %v196 = vld [vmem:[%s173 + $0x28] sm:$0xf]
      %v197 = vld [vmem:[%s173 + $0x2c] sm:$0xf]
      %v198 = vld [vmem:[%s173 + $0x30] sm:$0xf]
      %v199 = vld [vmem:[%s173 + $0x34] sm:$0xf]
      %v200 = vld [vmem:[%s173 + $0x38] sm:$0xf]
      %v201 = vld [vmem:[%s173 + $0x3c] sm:$0xf]
      %v202 = vld [vmem:[%s173 + $0x40] sm:$0xf]
      %v203 = vld [vmem:[%s173 + $0x44] sm:$0xf]
      %v204 = vld [vmem:[%s173 + $0x48] sm:$0xf]
      %v205 = vld [vmem:[%s173 + $0x4c] sm:$0xf]
      %v206 = vld [vmem:[%s173 + $0x50] sm:$0xf]
      %v207 = vld [vmem:[%s173 + $0x54] sm:$0xf]
      %v208 = vld [vmem:[%s173 + $0x58] sm:$0xf]
      %v209 = vld [vmem:[%s173 + $0x5c] sm:$0xf]
      %v210 = vld [vmem:[%s173 + $0x60] sm:$0xf]
      %v211 = vld [vmem:[%s173 + $0x64] sm:$0xf]
      %v212 = vld [vmem:[%s173 + $0x68] sm:$0xf]
      %v213 = vld [vmem:[%s173 + $0x6c] sm:$0xf]
      %v214 = vld [vmem:[%s173 + $0x70] sm:$0xf]
      %v215 = vld [vmem:[%s173 + $0x74] sm:$0xf]
      %v216 = vld [vmem:[%s173 + $0x78] sm:$0xf]
      %v217 = vld [vmem:[%s173 + $0x7c] sm:$0xf]
      %v218 = vld [vmem:[%s1] sm:$0xf]
      %v219 = vld [vmem:[%s1 + $0x4] sm:$0xf]
      %v220 = vld [vmem:[%s1 + $0x8] sm:$0xf]
      %v221 = vld [vmem:[%s1 + $0xc] sm:$0xf]
      %v222 = vld [vmem:[%s1 + $0x10] sm:$0x3]
      %v255 = vunpack.c.l.b16 %v186
      %v256 = vunpack.c.l.b16 %v187
      %v257 = vunpack.c.l.b16 %v188
      %v258 = vunpack.c.l.b16 %v189
      %v259 = vunpack.c.l.b16 %v190
      %v260 = vunpack.c.l.b16 %v191
      %v261 = vunpack.c.l.b16 %v192
      %v262 = vunpack.c.l.b16 %v193
      %v263 = vunpack.c.l.b16 %v194
      %v264 = vunpack.c.l.b16 %v195
      %v265 = vunpack.c.l.b16 %v196
      %v266 = vunpack.c.l.b16 %v197
      %v267 = vunpack.c.l.b16 %v198
      %v268 = vunpack.c.l.b16 %v199
      %v269 = vunpack.c.l.b16 %v200
      %v270 = vunpack.c.l.b16 %v201
      %v271 = vunpack.c.l.b16 %v202
      %v272 = vunpack.c.l.b16 %v203
      %v273 = vunpack.c.l.b16 %v204
      %v274 = vunpack.c.l.b16 %v205
      %v275 = vunpack.c.l.b16 %v206
      %v276 = vunpack.c.l.b16 %v207
      %v277 = vunpack.c.l.b16 %v208
      %v278 = vunpack.c.l.b16 %v209
      %v279 = vunpack.c.l.b16 %v210
      %v280 = vunpack.c.l.b16 %v211
      %v281 = vunpack.c.l.b16 %v212
      %v282 = vunpack.c.l.b16 %v213
      %v283 = vunpack.c.l.b16 %v214
      %v284 = vunpack.c.l.b16 %v215
      %v285 = vunpack.c.l.b16 %v216
      %v286 = vunpack.c.l.b16 %v217
      %v287 = vpack.c.b16 %v256, %v255
      %v288 = vpack.c.b16 %v258, %v257
      %v289 = vpack.c.b16 %v260, %v259
      %v290 = vpack.c.b16 %v262, %v261
      %v291 = vpack.c.b16 %v264, %v263
      %v292 = vpack.c.b16 %v266, %v265
      %v293 = vpack.c.b16 %v268, %v267
      %v294 = vpack.c.b16 %v270, %v269
      %v295 = vpack.c.b16 %v272, %v271
      %v296 = vpack.c.b16 %v274, %v273
      %v297 = vpack.c.b16 %v276, %v275
      %v298 = vpack.c.b16 %v278, %v277
      %v299 = vpack.c.b16 %v280, %v279
      %v300 = vpack.c.b16 %v282, %v281
      %v301 = vpack.c.b16 %v284, %v283
      %v302 = vpack.c.b16 %v286, %v285
      %v308 = vunpack.c.l.b16 %v218
      %v309 = vunpack.c.l.b16 %v219
      %v310 = vunpack.c.l.b16 %v220
      %v311 = vunpack.c.l.b16 %v221
      %v312 = vunpack.c.l.b16 %v222
      %v313 = vpack.c.b16 %v309, %v308
      %v314 = vpack.c.b16 %v311, %v310
      %v315 = vpack.c.b16 %v312, %v312
      %vm318 = vcmask 293888
      %v320 = vsel %vm318, %v287, 0
      %v323 = vsel %vm318, %v288, 0
      %v326 = vsel %vm318, %v289, 0
      %v329 = vsel %vm318, %v290, 0
      %v332 = vsel %vm318, %v291, 0
      %v335 = vsel %vm318, %v292, 0
      %v338 = vsel %vm318, %v293, 0
      %v341 = vsel %vm318, %v294, 0
      %v344 = vsel %vm318, %v295, 0
      %v347 = vsel %vm318, %v296, 0
      %v350 = vsel %vm318, %v297, 0
      %v353 = vsel %vm318, %v298, 0
      %v356 = vsel %vm318, %v299, 0
      %v359 = vsel %vm318, %v300, 0
      %v362 = vsel %vm318, %v301, 0
      %v365 = vsel %vm318, %v302, 0
      %vm367 = vcmask 1041408
      %v369 = vsel %vm367, %v315, 0
      %371 = vmatprep.subr.bf16.mxu0 0
      %372 = vmatpush1.bf16.msra.mxu0 %v313
      %373 = vmatprep.subr.bf16.mxu0 0
      %374 = vmatpush1.bf16.msra.mxu0 %v314
      %375 = vmatprep.subr.bf16.mxu0 0
      %376 = vmatpush1.bf16.msra.mxu0 %v369
      %377 = vmatprep.subr.bf16.mxu0 0
      %378 = vmatpush1.bf16.msra.mxu0 0
      %379 = vmatprep.subr.bf16.mxu0 0
      %380 = vmatpush1.bf16.msra.mxu0 0
      %381 = vmatprep.subr.bf16.mxu0 0
      %382 = vmatpush1.bf16.msra.mxu0 0
      %383 = vmatprep.subr.bf16.mxu0 0
      %384 = vmatpush1.bf16.msra.mxu0 0
      %385 = vmatprep.subr.bf16.mxu0 0
      %386 = vmatpush1.bf16.msra.mxu0 0
      %387 = vmatprep.subr.bf16.mxu0 0
      %388 = vmatpush1.bf16.msra.mxu0 0
      %389 = vmatprep.subr.bf16.mxu0 0
      %390 = vmatpush1.bf16.msra.mxu0 0
      %391 = vmatprep.subr.bf16.mxu0 0
      %392 = vmatpush1.bf16.msra.mxu0 0
      %393 = vmatprep.subr.bf16.mxu0 0
      %394 = vmatpush1.bf16.msra.mxu0 0
      %395 = vmatprep.subr.bf16.mxu0 0
      %396 = vmatpush1.bf16.msra.mxu0 0
      %397 = vmatprep.subr.bf16.mxu0 0
      %398 = vmatpush1.bf16.msra.mxu0 0
      %399 = vmatprep.subr.bf16.mxu0 0
      %400 = vmatpush1.bf16.msra.mxu0 0
      %401 = vmatprep.subr.bf16.mxu0 0
      %402 = vmatpush1.bf16.msra.mxu0 0
      %403 = vmatprep.mubr.bf16.mxu0 0
      %404 = vmatmul.mubr.bf16.gmra.mrb[0].mxu0 %v320
      %v405 = vpop.f32.mrb[0].mxu0
      %v406 = vadd.f32 0.0, %v405
      %v407 = vpop.f32.mrb[0].mxu0
      %v408 = vpop.f32.mrb[0].mxu0
      %v409 = vadd.f32 0.0, %v408
      %v410 = vpop.f32.mrb[0].mxu0
      %411 = vmatprep.mubr.bf16.mxu0 0
      %412 = vmatmul.mubr.bf16.gmra.mrb[0].mxu0 %v323
      %v413 = vpop.f32.mrb[0].mxu0
      %v414 = vadd.f32 0.0, %v413
      %v415 = vpop.f32.mrb[0].mxu0
      %v416 = vpop.f32.mrb[0].mxu0
      %v417 = vadd.f32 0.0, %v416
      %v418 = vpop.f32.mrb[0].mxu0
      %419 = vmatprep.mubr.bf16.mxu0 0
      %420 = vmatmul.mubr.bf16.gmra.mrb[0].mxu0 %v326
      %v421 = vpop.f32.mrb[0].mxu0
      %v422 = vadd.f32 0.0, %v421
      %v423 = vpop.f32.mrb[0].mxu0
      %v424 = vpop.f32.mrb[0].mxu0
      %v425 = vadd.f32 0.0, %v424
      %v426 = vpop.f32.mrb[0].mxu0
      %427 = vmatprep.mubr.bf16.mxu0 0
      %428 = vmatmul.mubr.bf16.gmra.mrb[0].mxu0 %v329
      %v429 = vpop.f32.mrb[0].mxu0
      %v430 = vadd.f32 0.0, %v429
      %v431 = vpop.f32.mrb[0].mxu0
      %v432 = vpop.f32.mrb[0].mxu0
      %v433 = vadd.f32 0.0, %v432
      %v434 = vpop.f32.mrb[0].mxu0
      %435 = vmatprep.mubr.bf16.mxu0 0
      %436 = vmatmul.mubr.bf16.gmra.mrb[0].mxu0 %v332
      %v437 = vpop.f32.mrb[0].mxu0
      %v438 = vadd.f32 0.0, %v437
      %v439 = vpop.f32.mrb[0].mxu0
      %v440 = vpop.f32.mrb[0].mxu0
      %v441 = vadd.f32 0.0, %v440
      %v442 = vpop.f32.mrb[0].mxu0
      %443 = vmatprep.mubr.bf16.mxu0 0
      %444 = vmatmul.mubr.bf16.gmra.mrb[0].mxu0 %v335
      %v445 = vpop.f32.mrb[0].mxu0
      %v446 = vadd.f32 0.0, %v445
      %v447 = vpop.f32.mrb[0].mxu0
      %v448 = vpop.f32.mrb[0].mxu0
      %v449 = vadd.f32 0.0, %v448
      %v450 = vpop.f32.mrb[0].mxu0
      %451 = vmatprep.mubr.bf16.mxu0 0
      %452 = vmatmul.mubr.bf16.gmra.mrb[0].mxu0 %v338
      %v453 = vpop.f32.mrb[0].mxu0
      %v454 = vadd.f32 0.0, %v453
      %v455 = vpop.f32.mrb[0].mxu0
      %v456 = vpop.f32.mrb[0].mxu0
      %v457 = vadd.f32 0.0, %v456
      %v458 = vpop.f32.mrb[0].mxu0
      %459 = vmatprep.mubr.bf16.mxu0 0
      %460 = vmatmul.mubr.bf16.gmra.mrb[0].mxu0 %v341
      %v461 = vpop.f32.mrb[0].mxu0
      %v462 = vadd.f32 0.0, %v461
      %v463 = vpop.f32.mrb[0].mxu0
      %v464 = vpop.f32.mrb[0].mxu0
      %v465 = vadd.f32 0.0, %v464
      %v466 = vpop.f32.mrb[0].mxu0
      %467 = vmatprep.mubr.bf16.mxu0 0
      %468 = vmatmul.mubr.bf16.gmra.mrb[0].mxu0 %v344
      %v469 = vpop.f32.mrb[0].mxu0
      %v470 = vadd.f32 0.0, %v469
      %v471 = vpop.f32.mrb[0].mxu0
      %v472 = vpop.f32.mrb[0].mxu0
      %v473 = vadd.f32 0.0, %v472
      %v474 = vpop.f32.mrb[0].mxu0
      %475 = vmatprep.mubr.bf16.mxu0 0
      %476 = vmatmul.mubr.bf16.gmra.mrb[0].mxu0 %v347
      %v477 = vpop.f32.mrb[0].mxu0
      %v478 = vadd.f32 0.0, %v477
      %v479 = vpop.f32.mrb[0].mxu0
      %v480 = vpop.f32.mrb[0].mxu0
      %v481 = vadd.f32 0.0, %v480
      %v482 = vpop.f32.mrb[0].mxu0
      %483 = vmatprep.mubr.bf16.mxu0 0
      %484 = vmatmul.mubr.bf16.gmra.mrb[0].mxu0 %v350
      %v485 = vpop.f32.mrb[0].mxu0
      %v486 = vadd.f32 0.0, %v485
      %v487 = vpop.f32.mrb[0].mxu0
      %v488 = vpop.f32.mrb[0].mxu0
      %v489 = vadd.f32 0.0, %v488
      %v490 = vpop.f32.mrb[0].mxu0
      %491 = vmatprep.mubr.bf16.mxu0 0
      %492 = vmatmul.mubr.bf16.gmra.mrb[0].mxu0 %v353
      %v493 = vpop.f32.mrb[0].mxu0
      %v494 = vadd.f32 0.0, %v493
      %v495 = vpop.f32.mrb[0].mxu0
      %v496 = vpop.f32.mrb[0].mxu0
      %v497 = vadd.f32 0.0, %v496
      %v498 = vpop.f32.mrb[0].mxu0
      %499 = vmatprep.mubr.bf16.mxu0 0
      %500 = vmatmul.mubr.bf16.gmra.mrb[0].mxu0 %v356
      %v501 = vpop.f32.mrb[0].mxu0
      %v502 = vadd.f32 0.0, %v501
      %v503 = vpop.f32.mrb[0].mxu0
      %v504 = vpop.f32.mrb[0].mxu0
      %v505 = vadd.f32 0.0, %v504
      %v506 = vpop.f32.mrb[0].mxu0
      %507 = vmatprep.mubr.bf16.mxu0 0
      %508 = vmatmul.mubr.bf16.gmra.mrb[0].mxu0 %v359
      %v509 = vpop.f32.mrb[0].mxu0
      %v510 = vadd.f32 0.0, %v509
      %v511 = vpop.f32.mrb[0].mxu0
      %v512 = vpop.f32.mrb[0].mxu0
      %v513 = vadd.f32 0.0, %v512
      %v514 = vpop.f32.mrb[0].mxu0
      %515 = vmatprep.mubr.bf16.mxu0 0
      %516 = vmatmul.mubr.bf16.gmra.mrb[0].mxu0 %v362
      %v517 = vpop.f32.mrb[0].mxu0
      %v518 = vadd.f32 0.0, %v517
      %v519 = vpop.f32.mrb[0].mxu0
      %v520 = vpop.f32.mrb[0].mxu0
      %v521 = vadd.f32 0.0, %v520
      %v522 = vpop.f32.mrb[0].mxu0
      %523 = vmatprep.mubr.bf16.mxu0 0
      %524 = vmatmul.mubr.bf16.gmra.mrb[0].mxu0 %v365
      %v525 = vpop.f32.mrb[0].mxu0
      %v526 = vadd.f32 0.0, %v525
      %v527 = vpop.f32.mrb[0].mxu0
      %v528 = vpop.f32.mrb[0].mxu0
      %v529 = vadd.f32 0.0, %v528
      %v530 = vpop.f32.mrb[0].mxu0
      %531 = vdwg.mxu0
      %vm532 = vcmask 64512
      %533 = vst.msk [vmem:[%s179] sm:$0xff] %vm532, %v406
      %534 = vst.msk [vmem:[%s179 + $0x8] sm:$0xff] %vm532, %v409
      %535 = vst.msk [vmem:[%s179 + $0x10] sm:$0xff] %vm532, %v414
      %536 = vst.msk [vmem:[%s179 + $0x18] sm:$0xff] %vm532, %v417
      %537 = vst.msk [vmem:[%s179 + $0x20] sm:$0xff] %vm532, %v422
      %538 = vst.msk [vmem:[%s179 + $0x28] sm:$0xff] %vm532, %v425
      %539 = vst.msk [vmem:[%s179 + $0x30] sm:$0xff] %vm532, %v430
      %540 = vst.msk [vmem:[%s179 + $0x38] sm:$0xff] %vm532, %v433
      %541 = vst.msk [vmem:[%s179 + $0x40] sm:$0xff] %vm532, %v438
      %542 = vst.msk [vmem:[%s179 + $0x48] sm:$0xff] %vm532, %v441
      %543 = vst.msk [vmem:[%s179 + $0x50] sm:$0xff] %vm532, %v446
      %544 = vst.msk [vmem:[%s179 + $0x58] sm:$0xff] %vm532, %v449
      %545 = vst.msk [vmem:[%s179 + $0x60] sm:$0xff] %vm532, %v454
      %546 = vst.msk [vmem:[%s179 + $0x68] sm:$0xff] %vm532, %v457
      %547 = vst.msk [vmem:[%s179 + $0x70] sm:$0xff] %vm532, %v462
      %548 = vst.msk [vmem:[%s179 + $0x78] sm:$0xff] %vm532, %v465
      %549 = vst.msk [vmem:[%s179 + $0x80] sm:$0xff] %vm532, %v470
      %550 = vst.msk [vmem:[%s179 + $0x88] sm:$0xff] %vm532, %v473
      %551 = vst.msk [vmem:[%s179 + $0x90] sm:$0xff] %vm532, %v478
      %552 = vst.msk [vmem:[%s179 + $0x98] sm:$0xff] %vm532, %v481
      %553 = vst.msk [vmem:[%s179 + $0xa0] sm:$0xff] %vm532, %v486
      %554 = vst.msk [vmem:[%s179 + $0xa8] sm:$0xff] %vm532, %v489
      %555 = vst.msk [vmem:[%s179 + $0xb0] sm:$0xff] %vm532, %v494
      %556 = vst.msk [vmem:[%s179 + $0xb8] sm:$0xff] %vm532, %v497
      %557 = vst.msk [vmem:[%s179 + $0xc0] sm:$0xff] %vm532, %v502
      %558 = vst.msk [vmem:[%s179 + $0xc8] sm:$0xff] %vm532, %v505
      %559 = vst.msk [vmem:[%s179 + $0xd0] sm:$0xff] %vm532, %v510
      %560 = vst.msk [vmem:[%s179 + $0xd8] sm:$0xff] %vm532, %v513
      %561 = vst.msk [vmem:[%s179 + $0xe0] sm:$0xff] %vm532, %v518
      %562 = vst.msk [vmem:[%s179 + $0xe8] sm:$0xff] %vm532, %v521
      %563 = vst.msk [vmem:[%s179 + $0xf0] sm:$0xff] %vm532, %v526
      %564 = vst.msk [vmem:[%s179 + $0xf8] sm:$0xff] %vm532, %v529
      %s565 = smul.u32 %s15, 256
      %s566 = ssub.s32 648, %s565
      %p567 = scmp.lt.s32.totalorder %s566, 256
      %s568 = scalar_select %p567, %s566, 256
      %s569 = scvt.s32.f32 %s568
      %v570 = vsel %vm532, %v406, 0.0
      %v571 = vsel %vm532, %v409, 0.0
      %v572 = vadd.f32 %v570, %v571
      %v573 = vsel %vm532, %v414, 0.0
      %v574 = vadd.f32 %v572, %v573
      %v575 = vsel %vm532, %v417, 0.0
      %v576 = vadd.f32 %v574, %v575
      %v577 = vsel %vm532, %v422, 0.0
      %v578 = vadd.f32 %v576, %v577
      %v579 = vsel %vm532, %v425, 0.0
      %v580 = vadd.f32 %v578, %v579
      %v581 = vsel %vm532, %v430, 0.0
      %v582 = vadd.f32 %v580, %v581
      %v583 = vsel %vm532, %v433, 0.0
      %v584 = vadd.f32 %v582, %v583
      %v585 = vsel %vm532, %v438, 0.0
      %v586 = vadd.f32 %v584, %v585
      %v587 = vsel %vm532, %v441, 0.0
      %v588 = vadd.f32 %v586, %v587
      %v589 = vsel %vm532, %v446, 0.0
      %v590 = vadd.f32 %v588, %v589
      %v591 = vsel %vm532, %v449, 0.0
      %v592 = vadd.f32 %v590, %v591
      %v593 = vsel %vm532, %v454, 0.0
      %v594 = vadd.f32 %v592, %v593
      %v595 = vsel %vm532, %v457, 0.0
      %v596 = vadd.f32 %v594, %v595
      %v597 = vsel %vm532, %v462, 0.0
      %v598 = vadd.f32 %v596, %v597
      %v599 = vsel %vm532, %v465, 0.0
      %v600 = vadd.f32 %v598, %v599
      %v601 = vsel %vm532, %v470, 0.0
      %v602 = vadd.f32 %v600, %v601
      %v603 = vsel %vm532, %v473, 0.0
      %v604 = vadd.f32 %v602, %v603
      %v605 = vsel %vm532, %v478, 0.0
      %v606 = vadd.f32 %v604, %v605
      %v607 = vsel %vm532, %v481, 0.0
      %v608 = vadd.f32 %v606, %v607
      %v609 = vsel %vm532, %v486, 0.0
      %v610 = vadd.f32 %v608, %v609
      %v611 = vsel %vm532, %v489, 0.0
      %v612 = vadd.f32 %v610, %v611
      %v613 = vsel %vm532, %v494, 0.0
      %v614 = vadd.f32 %v612, %v613
      %v615 = vsel %vm532, %v497, 0.0
      %v616 = vadd.f32 %v614, %v615
      %v617 = vsel %vm532, %v502, 0.0
      %v618 = vadd.f32 %v616, %v617
      %v619 = vsel %vm532, %v505, 0.0
      %v620 = vadd.f32 %v618, %v619
      %v621 = vsel %vm532, %v510, 0.0
      %v622 = vadd.f32 %v620, %v621
      %v623 = vsel %vm532, %v513, 0.0
      %v624 = vadd.f32 %v622, %v623
      %v625 = vsel %vm532, %v518, 0.0
      %v626 = vadd.f32 %v624, %v625
      %v627 = vsel %vm532, %v521, 0.0
      %v628 = vadd.f32 %v626, %v627
      %v629 = vsel %vm532, %v526, 0.0
      %v630 = vadd.f32 %v628, %v629
      %v631 = vsel %vm532, %v529, 0.0
      %v632 = vadd.f32 %v630, %v631
      %v633 = vrot.slane %v632, 4
      %v634 = vadd.f32 %v632, %v633
      %v635 = vrot.slane %v634, 2
      %v636 = vadd.f32 %v634, %v635
      %v637 = vrot.slane %v636, 1
      %v638 = vadd.f32 %v636, %v637
      %v639 = vstv %s569
      %v640 = vrcp.pop %v639
      %v641 = vmul.f32 %v638, %v640
      %v642 = vlaneseq
      %v643 = vshrl.u32 %v642, 7
      %v644 = vadd.s32 %v643, 8
      %v645 = vadd.s32 %v643, 16
      %v646 = vadd.s32 %v643, 24
      %v647 = vadd.s32 %v643, 32
      %v648 = vadd.s32 %v643, 40
      %v649 = vadd.s32 %v643, 48
      %v650 = vadd.s32 %v643, 56
      %v651 = vadd.s32 %v643, 64
      %v652 = vadd.s32 %v643, 72
      %v653 = vadd.s32 %v643, 80
      %v654 = vadd.s32 %v643, 88
      %v655 = vadd.s32 %v643, 96
      %v656 = vadd.s32 %v643, 104
      %v657 = vadd.s32 %v643, 112
      %v658 = vadd.s32 %v643, 120
      %v659 = vadd.s32 %v643, 128
      %v660 = vadd.s32 %v643, 136
      %v661 = vadd.s32 %v643, 144
      %v662 = vadd.s32 %v643, 152
      %v663 = vadd.s32 %v643, 160
      %v664 = vadd.s32 %v643, 168
      %v665 = vadd.s32 %v643, 176
      %v666 = vadd.s32 %v643, 184
      %v667 = vadd.s32 %v643, 192
      %v668 = vadd.s32 %v643, 200
      %v669 = vadd.s32 %v643, 208
      %v670 = vadd.s32 %v643, 216
      %v671 = vadd.s32 %v643, 224
      %v672 = vadd.s32 %v643, 232
      %v673 = vadd.s32 %v643, 240
      %v674 = vadd.s32 %v643, 248
      %v675 = vstv %s565
      %v676 = vadd.s32 %v643, %v675
      %v677 = vadd.s32 %v644, %v675
      %v678 = vadd.s32 %v645, %v675
      %v679 = vadd.s32 %v646, %v675
      %v680 = vadd.s32 %v647, %v675
      %v681 = vadd.s32 %v648, %v675
      %v682 = vadd.s32 %v649, %v675
      %v683 = vadd.s32 %v650, %v675
      %v684 = vadd.s32 %v651, %v675
      %v685 = vadd.s32 %v652, %v675
      %v686 = vadd.s32 %v653, %v675
      %v687 = vadd.s32 %v654, %v675
      %v688 = vadd.s32 %v655, %v675
      %v689 = vadd.s32 %v656, %v675
      %v690 = vadd.s32 %v657, %v675
      %v691 = vadd.s32 %v658, %v675
      %v692 = vadd.s32 %v659, %v675
      %v693 = vadd.s32 %v660, %v675
      %v694 = vadd.s32 %v661, %v675
      %v695 = vadd.s32 %v662, %v675
      %v696 = vadd.s32 %v663, %v675
      %v697 = vadd.s32 %v664, %v675
      %v698 = vadd.s32 %v665, %v675
      %v699 = vadd.s32 %v666, %v675
      %v700 = vadd.s32 %v667, %v675
      %v701 = vadd.s32 %v668, %v675
      %v702 = vadd.s32 %v669, %v675
      %v703 = vadd.s32 %v670, %v675
      %v704 = vadd.s32 %v671, %v675
      %v705 = vadd.s32 %v672, %v675
      %v706 = vadd.s32 %v673, %v675
      %v707 = vadd.s32 %v674, %v675
      %vm708 = vcmp.lt.s32.totalorder %v676, 648
      %vm709 = vcmp.lt.s32.totalorder %v677, 648
      %vm710 = vcmp.lt.s32.totalorder %v678, 648
      %vm711 = vcmp.lt.s32.totalorder %v679, 648
      %vm712 = vcmp.lt.s32.totalorder %v680, 648
      %vm713 = vcmp.lt.s32.totalorder %v681, 648
      %vm714 = vcmp.lt.s32.totalorder %v682, 648
      %vm715 = vcmp.lt.s32.totalorder %v683, 648
      %vm716 = vcmp.lt.s32.totalorder %v684, 648
      %vm717 = vcmp.lt.s32.totalorder %v685, 648
      %vm718 = vcmp.lt.s32.totalorder %v686, 648
      %vm719 = vcmp.lt.s32.totalorder %v687, 648
      %vm720 = vcmp.lt.s32.totalorder %v688, 648
      %vm721 = vcmp.lt.s32.totalorder %v689, 648
      %vm722 = vcmp.lt.s32.totalorder %v690, 648
      %vm723 = vcmp.lt.s32.totalorder %v691, 648
      %vm724 = vcmp.lt.s32.totalorder %v692, 648
      %vm725 = vcmp.lt.s32.totalorder %v693, 648
      %vm726 = vcmp.lt.s32.totalorder %v694, 648
      %vm727 = vcmp.lt.s32.totalorder %v695, 648
      %vm728 = vcmp.lt.s32.totalorder %v696, 648
      %vm729 = vcmp.lt.s32.totalorder %v697, 648
      %vm730 = vcmp.lt.s32.totalorder %v698, 648
      %vm731 = vcmp.lt.s32.totalorder %v699, 648
      %vm732 = vcmp.lt.s32.totalorder %v700, 648
      %vm733 = vcmp.lt.s32.totalorder %v701, 648
      %vm734 = vcmp.lt.s32.totalorder %v702, 648
      %vm735 = vcmp.lt.s32.totalorder %v703, 648
      %vm736 = vcmp.lt.s32.totalorder %v704, 648
      %vm737 = vcmp.lt.s32.totalorder %v705, 648
      %vm738 = vcmp.lt.s32.totalorder %v706, 648
      %vm739 = vcmp.lt.s32.totalorder %v707, 648
      %v740 = vsub.f32 %v406, %v641
      %v741 = vsub.f32 %v409, %v641
      %v742 = vsub.f32 %v414, %v641
      %v743 = vsub.f32 %v417, %v641
      %v744 = vsub.f32 %v422, %v641
      %v745 = vsub.f32 %v425, %v641
      %v746 = vsub.f32 %v430, %v641
      %v747 = vsub.f32 %v433, %v641
      %v748 = vsub.f32 %v438, %v641
      %v749 = vsub.f32 %v441, %v641
      %v750 = vsub.f32 %v446, %v641
      %v751 = vsub.f32 %v449, %v641
      %v752 = vsub.f32 %v454, %v641
      %v753 = vsub.f32 %v457, %v641
      %v754 = vsub.f32 %v462, %v641
      %v755 = vsub.f32 %v465, %v641
      %v756 = vsub.f32 %v470, %v641
      %v757 = vsub.f32 %v473, %v641
      %v758 = vsub.f32 %v478, %v641
      %v759 = vsub.f32 %v481, %v641
      %v760 = vsub.f32 %v486, %v641
      %v761 = vsub.f32 %v489, %v641
      %v762 = vsub.f32 %v494, %v641
      %v763 = vsub.f32 %v497, %v641
      %v764 = vsub.f32 %v502, %v641
      %v765 = vsub.f32 %v505, %v641
      %v766 = vsub.f32 %v510, %v641
      %v767 = vsub.f32 %v513, %v641
      %v768 = vsub.f32 %v518, %v641
      %v769 = vsub.f32 %v521, %v641
      %v770 = vsub.f32 %v526, %v641
      %v771 = vsub.f32 %v529, %v641
      %v772 = vsel %vm708, 1, 0
      %v773 = vsel %vm709, 1, 0
      %v774 = vsel %vm710, 1, 0
      %v775 = vsel %vm711, 1, 0
      %v776 = vsel %vm712, 1, 0
      %v777 = vsel %vm713, 1, 0
      %v778 = vsel %vm714, 1, 0
      %v779 = vsel %vm715, 1, 0
      %v780 = vsel %vm716, 1, 0
      %v781 = vsel %vm717, 1, 0
      %v782 = vsel %vm718, 1, 0
      %v783 = vsel %vm719, 1, 0
      %v784 = vsel %vm720, 1, 0
      %v785 = vsel %vm721, 1, 0
      %v786 = vsel %vm722, 1, 0
      %v787 = vsel %vm723, 1, 0
      %v788 = vsel %vm724, 1, 0
      %v789 = vsel %vm725, 1, 0
      %v790 = vsel %vm726, 1, 0
      %v791 = vsel %vm727, 1, 0
      %v792 = vsel %vm728, 1, 0
      %v793 = vsel %vm729, 1, 0
      %v794 = vsel %vm730, 1, 0
      %v795 = vsel %vm731, 1, 0
      %v796 = vsel %vm732, 1, 0
      %v797 = vsel %vm733, 1, 0
      %v798 = vsel %vm734, 1, 0
      %v799 = vsel %vm735, 1, 0
      %v800 = vsel %vm736, 1, 0
      %v801 = vsel %vm737, 1, 0
      %v802 = vsel %vm738, 1, 0
      %v803 = vsel %vm739, 1, 0
      %vm804 = vcmp.eq.s32.totalorder %v772, 1
      %vm805 = vcmp.eq.s32.totalorder %v773, 1
      %vm806 = vcmp.eq.s32.totalorder %v774, 1
      %vm807 = vcmp.eq.s32.totalorder %v775, 1
      %vm808 = vcmp.eq.s32.totalorder %v776, 1
      %vm809 = vcmp.eq.s32.totalorder %v777, 1
      %vm810 = vcmp.eq.s32.totalorder %v778, 1
      %vm811 = vcmp.eq.s32.totalorder %v779, 1
      %vm812 = vcmp.eq.s32.totalorder %v780, 1
      %vm813 = vcmp.eq.s32.totalorder %v781, 1
      %vm814 = vcmp.eq.s32.totalorder %v782, 1
      %vm815 = vcmp.eq.s32.totalorder %v783, 1
      %vm816 = vcmp.eq.s32.totalorder %v784, 1
      %vm817 = vcmp.eq.s32.totalorder %v785, 1
      %vm818 = vcmp.eq.s32.totalorder %v786, 1
      %vm819 = vcmp.eq.s32.totalorder %v787, 1
      %vm820 = vcmp.eq.s32.totalorder %v788, 1
      %vm821 = vcmp.eq.s32.totalorder %v789, 1
      %vm822 = vcmp.eq.s32.totalorder %v790, 1
      %vm823 = vcmp.eq.s32.totalorder %v791, 1
      %vm824 = vcmp.eq.s32.totalorder %v792, 1
      %vm825 = vcmp.eq.s32.totalorder %v793, 1
      %vm826 = vcmp.eq.s32.totalorder %v794, 1
      %vm827 = vcmp.eq.s32.totalorder %v795, 1
      %vm828 = vcmp.eq.s32.totalorder %v796, 1
      %vm829 = vcmp.eq.s32.totalorder %v797, 1
      %vm830 = vcmp.eq.s32.totalorder %v798, 1
      %vm831 = vcmp.eq.s32.totalorder %v799, 1
      %vm832 = vcmp.eq.s32.totalorder %v800, 1
      %vm833 = vcmp.eq.s32.totalorder %v801, 1
      %vm834 = vcmp.eq.s32.totalorder %v802, 1
      %vm835 = vcmp.eq.s32.totalorder %v803, 1
      %v836 = vsel %vm804, %v740, 0.0
      %v837 = vsel %vm805, %v741, 0.0
      %v838 = vsel %vm806, %v742, 0.0
      %v839 = vsel %vm807, %v743, 0.0
      %v840 = vsel %vm808, %v744, 0.0
      %v841 = vsel %vm809, %v745, 0.0
      %v842 = vsel %vm810, %v746, 0.0
      %v843 = vsel %vm811, %v747, 0.0
      %v844 = vsel %vm812, %v748, 0.0
      %v845 = vsel %vm813, %v749, 0.0
      %v846 = vsel %vm814, %v750, 0.0
      %v847 = vsel %vm815, %v751, 0.0
      %v848 = vsel %vm816, %v752, 0.0
      %v849 = vsel %vm817, %v753, 0.0
      %v850 = vsel %vm818, %v754, 0.0
      %v851 = vsel %vm819, %v755, 0.0
      %v852 = vsel %vm820, %v756, 0.0
      %v853 = vsel %vm821, %v757, 0.0
      %v854 = vsel %vm822, %v758, 0.0
      %v855 = vsel %vm823, %v759, 0.0
      %v856 = vsel %vm824, %v760, 0.0
      %v857 = vsel %vm825, %v761, 0.0
      %v858 = vsel %vm826, %v762, 0.0
      %v859 = vsel %vm827, %v763, 0.0
      %v860 = vsel %vm828, %v764, 0.0
      %v861 = vsel %vm829, %v765, 0.0
      %v862 = vsel %vm830, %v766, 0.0
      %v863 = vsel %vm831, %v767, 0.0
      %v864 = vsel %vm832, %v768, 0.0
      %v865 = vsel %vm833, %v769, 0.0
      %v866 = vsel %vm834, %v770, 0.0
      %v867 = vsel %vm835, %v771, 0.0
      %v868 = vmul.f32 %v836, %v836
      %v869 = vmul.f32 %v837, %v837
      %v870 = vmul.f32 %v838, %v838
      %v871 = vmul.f32 %v839, %v839
      %v872 = vmul.f32 %v840, %v840
      %v873 = vmul.f32 %v841, %v841
      %v874 = vmul.f32 %v842, %v842
      %v875 = vmul.f32 %v843, %v843
      %v876 = vmul.f32 %v844, %v844
      %v877 = vmul.f32 %v845, %v845
      %v878 = vmul.f32 %v846, %v846
      %v879 = vmul.f32 %v847, %v847
      %v880 = vmul.f32 %v848, %v848
      %v881 = vmul.f32 %v849, %v849
      %v882 = vmul.f32 %v850, %v850
      %v883 = vmul.f32 %v851, %v851
      %v884 = vmul.f32 %v852, %v852
      %v885 = vmul.f32 %v853, %v853
      %v886 = vmul.f32 %v854, %v854
      %v887 = vmul.f32 %v855, %v855
      %v888 = vmul.f32 %v856, %v856
      %v889 = vmul.f32 %v857, %v857
      %v890 = vmul.f32 %v858, %v858
      %v891 = vmul.f32 %v859, %v859
      %v892 = vmul.f32 %v860, %v860
      %v893 = vmul.f32 %v861, %v861
      %v894 = vmul.f32 %v862, %v862
      %v895 = vmul.f32 %v863, %v863
      %v896 = vmul.f32 %v864, %v864
      %v897 = vmul.f32 %v865, %v865
      %v898 = vmul.f32 %v866, %v866
      %v899 = vmul.f32 %v867, %v867
      %v900 = vsel %vm532, %v868, 0.0
      %v901 = vsel %vm532, %v869, 0.0
      %v902 = vadd.f32 %v900, %v901
      %v903 = vsel %vm532, %v870, 0.0
      %v904 = vadd.f32 %v902, %v903
      %v905 = vsel %vm532, %v871, 0.0
      %v906 = vadd.f32 %v904, %v905
      %v907 = vsel %vm532, %v872, 0.0
      %v908 = vadd.f32 %v906, %v907
      %v909 = vsel %vm532, %v873, 0.0
      %v910 = vadd.f32 %v908, %v909
      %v911 = vsel %vm532, %v874, 0.0
      %v912 = vadd.f32 %v910, %v911
      %v913 = vsel %vm532, %v875, 0.0
      %v914 = vadd.f32 %v912, %v913
      %v915 = vsel %vm532, %v876, 0.0
      %v916 = vadd.f32 %v914, %v915
      %v917 = vsel %vm532, %v877, 0.0
      %v918 = vadd.f32 %v916, %v917
      %v919 = vsel %vm532, %v878, 0.0
      %v920 = vadd.f32 %v918, %v919
      %v921 = vsel %vm532, %v879, 0.0
      %v922 = vadd.f32 %v920, %v921
      %v923 = vsel %vm532, %v880, 0.0
      %v924 = vadd.f32 %v922, %v923
      %v925 = vsel %vm532, %v881, 0.0
      %v926 = vadd.f32 %v924, %v925
      %v927 = vsel %vm532, %v882, 0.0
      %v928 = vadd.f32 %v926, %v927
      %v929 = vsel %vm532, %v883, 0.0
      %v930 = vadd.f32 %v928, %v929
      %v931 = vsel %vm532, %v884, 0.0
      %v932 = vadd.f32 %v930, %v931
      %v933 = vsel %vm532, %v885, 0.0
      %v934 = vadd.f32 %v932, %v933
      %v935 = vsel %vm532, %v886, 0.0
      %v936 = vadd.f32 %v934, %v935
      %v937 = vsel %vm532, %v887, 0.0
      %v938 = vadd.f32 %v936, %v937
      %v939 = vsel %vm532, %v888, 0.0
      %v940 = vadd.f32 %v938, %v939
      %v941 = vsel %vm532, %v889, 0.0
      %v942 = vadd.f32 %v940, %v941
      %v943 = vsel %vm532, %v890, 0.0
      %v944 = vadd.f32 %v942, %v943
      %v945 = vsel %vm532, %v891, 0.0
      %v946 = vadd.f32 %v944, %v945
      %v947 = vsel %vm532, %v892, 0.0
      %v948 = vadd.f32 %v946, %v947
      %v949 = vsel %vm532, %v893, 0.0
      %v950 = vadd.f32 %v948, %v949
      %v951 = vsel %vm532, %v894, 0.0
      %v952 = vadd.f32 %v950, %v951
      %v953 = vsel %vm532, %v895, 0.0
      %v954 = vadd.f32 %v952, %v953
      %v955 = vsel %vm532, %v896, 0.0
      %v956 = vadd.f32 %v954, %v955
      %v957 = vsel %vm532, %v897, 0.0
      %v958 = vadd.f32 %v956, %v957
      %v959 = vsel %vm532, %v898, 0.0
      %v960 = vadd.f32 %v958, %v959
      %v961 = vsel %vm532, %v899, 0.0
      %v962 = vadd.f32 %v960, %v961
      %v963 = vrot.slane %v962, 4
      %v964 = vadd.f32 %v962, %v963
      %v965 = vrot.slane %v964, 2
      %v966 = vadd.f32 %v964, %v965
      %v967 = vrot.slane %v966, 1
      %v968 = vadd.f32 %v966, %v967
      %vm969 = vcmask 1040384
      %v970 = vsel %vm969, %v638, %v968
      %vm971 = vcmask 58368
      %972 = vst.msk [vmem:[%s184] sm:$0x3] %vm971, %v970
      %s973 = smul.u32 32, %s15
      %p974 = scmp.lt.s32.totalorder %s973, 95
      %s975 = scalar_select %p974, %s973, 95
      %s976 = smul.addr %s975, 8
      %s977 = scalar_lea.vmem %s2, %s976
      %p978 = scmp.lt.s32.totalorder %s15, 2
      %s979 = scalar_select %p978, %s15, 2
      %s980 = smul.addr %s979, 2
      %s981 = scalar_lea.vmem %s3, %s980
      // Predicated region
      $region29: #{up_forward.2} parent=27 // pred_check
        %p982 = pneg %p80
      $region30: #{up_forward.2} parent=27 // pred_check_branch
        %984 = sbr.rel (%p982) target = $region32
      $region31: #{up_forward.2} parent=27 // pred_region
        %s985 = smul.u32 32, %s15
      $region32: #{up_forward.2} parent=27 // pred_fallthru
        _
      // Predicated region
      $region33: #{up_forward.2} parent=27 // pred_check
        %p986 = pneg %p106
      $region34: #{up_forward.2} parent=27 // pred_check_branch
        %988 = sbr.rel (%p986) target = $region36
      $region35: #{up_forward.2} parent=27 // pred_region
        _
      $region36: #{up_forward.2} parent=27 // pred_fallthru
        _
    $region28: #{up_forward.2} parent=5 // pred_fallthru
      _
    %p989 = scmp.le.s32.totalorder 2, %s10
    // Predicated region
    $region37: #{up_forward.2} parent=5 // pred_check
      %p990 = pneg %p989
    $region38: #{up_forward.2} parent=5 // pred_check_branch
      %992 = sbr.rel (%p990) target = $region40
    $region39: #{up_forward.2} parent=5 // pred_region
      %s993 = ssub.s32 %s10, 2
      // Predicated region
      $region41: #{up_forward.2} parent=39 // pred_check
        %p994 = pneg %p86
      $region42: #{up_forward.2} parent=39 // pred_check_branch
        %996 = sbr.rel (%p994) target = $region44
      $region43: #{up_forward.2} parent=39 // pred_region
        %s997 = smul.u32 32, %s16
        %p998 = scmp.lt.s32.totalorder %s997, 95
        %s999 = scalar_select %p998, %s997, 95
        %s1000 = smul.addr %s999, 8
        %s1001 = scalar_lea.vmem %s2, %s1000
      $region44: #{up_forward.2} parent=39 // pred_fallthru
        _
      // Predicated region
      $region45: #{up_forward.2} parent=39 // pred_check
        %p1002 = pneg %p112
      $region46: #{up_forward.2} parent=39 // pred_check_branch
        %1004 = sbr.rel (%p1002) target = $region48
      $region47: #{up_forward.2} parent=39 // pred_region
        %p1005 = scmp.lt.s32.totalorder %s16, 2
        %s1006 = scalar_select %p1005, %s16, 2
        %s1007 = smul.addr %s1006, 2
        %s1008 = scalar_lea.vmem %s3, %s1007
      $region48: #{up_forward.2} parent=39 // pred_fallthru
        _
    $region40: #{up_forward.2} parent=5 // pred_fallthru
      _
  $region6: #{up_forward.2} parent=0 // loop_footer
    %s14 = sadd.s32 1, %s10
  $region7: #{up_forward.2} parent=0 // loop_footer_branch
    %9 = sbr.rel target = $region3
  $region8: #{up_forward.2} parent=0 // loop_exit
    _

</llo_original>
